<compile_context>
chip_gen: v7x
topology: tpu7x:2x2x1
jax: 0.10.0
libtpu: 0.0.40
codegen_flags: <defaults>
</compile_context>

<pallas_src>
import functools
import math

import jax
import jax.numpy as jnp
from jax.experimental import pallas as pl
from jax.experimental.pallas import tpu as pltpu


# ---------------------------------------------------------------------------
# Kernel
# ---------------------------------------------------------------------------
def _rmsnorm_kernel(x_ref, w_ref, o_ref, *, eps, inv_h):
    # x_ref: (tile_rows, H) input dtype; w_ref: (1, H) float32; o_ref: (tile_rows, H).
    # 1) Row-wise mean of squares in f32.  Cast inline (no named f32 tile temp) so
    #    Mosaic can fuse the cast into the reduction instead of materializing a
    #    tile_rows x H x 4B buffer in VMEM.
    mean_sq = jnp.sum(jnp.square(x_ref[...].astype(jnp.float32)),
                      axis=-1, keepdims=True) * inv_h
    inv = jax.lax.rsqrt(mean_sq + eps)                       # EUP rsqrt (free slot)
    # 2) Normalize: re-load + re-cast the block (vld/VALU slots have huge slack in a
    #    mem-bound kernel) rather than keeping the f32 tile live across step (1).
    normed = (x_ref[...].astype(jnp.float32) * inv).astype(x_ref.dtype)  # .type_as(x)
    o_ref[...] = (normed.astype(jnp.float32) * w_ref[...]).astype(o_ref.dtype)


# ---------------------------------------------------------------------------
# Tiling helpers
# ---------------------------------------------------------------------------
def _round_down(n, m):
    return (n // m) * m


_SUBLANE_PACK = {4: 8, 2: 16, 1: 32}


def _sublane_pack(dtype):
    return _SUBLANE_PACK.get(jnp.dtype(dtype).itemsize, 8)


def _tensorcores_per_chip():
    """2 on chips whose TensorCores share the grid via `parallel` dims (v7x, v4/v5p)."""
    try:
        kind = jax.devices()[0].device_kind.lower()
    except Exception:
        return 1
    if "v7" in kind:
        return 2
    if "v4" in kind or "v5p" in kind:   # megacore parts also shard parallel dims
        return 2
    return 1


def _vmem_limit_bytes():
    try:
        phys = int(pltpu.get_tpu_info().vmem_capacity_bytes)
    except Exception:
        phys = 64 << 20                              # conservative: v7x per-TC VMEM
    # ~8 MiB headroom for compiler temps; cap at ~110 MiB on 128 MiB parts (v5e/v6e).
    return int(max(32 << 20, min(phys - (8 << 20), 110 << 20)))


def _max_tile_rows(H, in_itemsize, out_itemsize, block_budget):
    # Input and output blocks are each double-buffered by the pipeline.
    per_row = 2 * H * in_itemsize + 2 * H * out_itemsize
    return max(1, block_budget // max(per_row, 1))


def _pick_tile_rows(rows, H, in_itemsize, out_itemsize, block_budget, pack, n_cores):
    t = int(min(_max_tile_rows(H, in_itemsize, out_itemsize, block_budget), 512))
    t = max(pack, _round_down(t, pack))              # 512 rows ~ HBM roofline knee

    if rows <= t:
        # Single step covers everything.  Only on multi-TC chips split once so both
        # cores get work, and never shrink a step below ~256 rows.
        if n_cores >= 2 and rows >= 512:
            half = ((rows + 1) // 2 + pack - 1) // pack * pack
            half = max(256, half)
            if half < rows:
                return half                          # 2 steps (2nd may be ragged)
        return rows                                  # full-dim block: always legal

    # Multi-step: prefer a tile that divides rows exactly (no ragged last block),
    # but don't give up more than ~2x tile size to find one.
    k = _round_down(t, pack)
    while k >= max(pack, t // 2):
        if rows % k == 0:
            return k
        k -= pack
    return t                                         # ragged last block (OOB-masked)


# ---------------------------------------------------------------------------
# Wrapper
# ---------------------------------------------------------------------------
def rms_norm(x, weight, eps=1e-5, tile_rows=None, out_dtype=None):
    """LLaMA RMSNorm.  x: (..., H);  weight: (H,).

    Default out_dtype == x.dtype (fast path: bf16 in -> bf16 out halves HBM
    writeback).  Pass out_dtype=jnp.float32 to reproduce the exact torch promotion
    `normed.type_as(x) * f32_weight`; the fast path differs only by the final
    downcast of that product.
    """
    orig_shape = x.shape
    H = orig_shape[-1]
    rows = int(math.prod(orig_shape[:-1])) if len(orig_shape) > 1 else 1

    if out_dtype is None:
        out_dtype = x.dtype
    out_dtype = jnp.dtype(out_dtype)

    x2d = x.reshape(rows, H)
    w2d = weight.reshape(1, H).astype(jnp.float32)

    in_itemsize = jnp.dtype(x.dtype).itemsize
    out_itemsize = out_dtype.itemsize
    pack = _sublane_pack(x.dtype)

    vmem_limit = _vmem_limit_bytes()
    block_budget = (3 * vmem_limit) // 4             # blocks; rest for reduction temps

    if tile_rows is None:
        tile_rows = _pick_tile_rows(rows, H, in_itemsize, out_itemsize,
                                    block_budget, pack, _tensorcores_per_chip())
    else:
        # Validate user tile: VMEM-feasible and sublane-aligned (or == rows).
        t_max = int(_max_tile_rows(H, in_itemsize, out_itemsize, block_budget))
        tile_rows = max(1, min(int(tile_rows), max(t_max, pack), rows))
        if tile_rows < rows:
            tile_rows = min(rows, max(pack, _round_down(tile_rows, pack)))

    grid = (pl.cdiv(rows, tile_rows),)               # last block may be ragged

    out = pl.pallas_call(
        functools.partial(_rmsnorm_kernel, eps=float(eps), inv_h=1.0 / float(H)),
        out_shape=jax.ShapeDtypeStruct((rows, H), out_dtype),
        grid_spec=pltpu.PrefetchScalarGridSpec(
            num_scalar_prefetch=0,
            grid=grid,
            in_specs=[
                pl.BlockSpec((tile_rows, H), lambda i: (i, 0)),
                # Constant block index: weight stays resident; no re-fetch per step.
                pl.BlockSpec((1, H), lambda i: (0, 0)),
            ],
            out_specs=pl.BlockSpec((tile_rows, H), lambda i: (i, 0)),
        ),
        compiler_params=pltpu.CompilerParams(
            dimension_semantics=("parallel",),
            vmem_limit_bytes=vmem_limit,
        ),
    )(x2d, w2d)

    return out.reshape(orig_shape)


# ---------------------------------------------------------------------------
# Pure-JAX reference (matches the PyTorch forward, f32 result)
# ---------------------------------------------------------------------------
def rms_norm_reference(x, weight, eps=1e-5):
    x_f32 = x.astype(jnp.float32)
    var = jnp.mean(x_f32 * x_f32, axis=-1, keepdims=True)
    normed = (x_f32 * jax.lax.rsqrt(var + eps)).astype(x.dtype)
    return normed.astype(jnp.float32) * weight.astype(jnp.float32)


if __name__ == "__main__":
    eps = 1e-5
    key = jax.random.PRNGKey(0)

    # Small shapes consistent with the module's forward: (batch, seq, hidden).
    batch, seq, hidden = 2, 8, 256
    # fp16=True in ModelArgs -> half-precision activations; bf16 is TPU-native.
    x = jax.random.normal(key, (batch, seq, hidden), dtype=jnp.float32).astype(jnp.bfloat16)
    # nn.Parameter(torch.ones(hidden_size)) -> deterministic ones, float32.
    weight = jnp.ones((hidden,), dtype=jnp.float32)

    ref = rms_norm_reference(x, weight, eps=eps)

    # Default fast path: out dtype == x dtype (halves HBM writeback).
    out = jax.block_until_ready(rms_norm(x, weight, eps=eps))
    assert out.shape == (batch, seq, hidden)
    assert out.dtype == jnp.bfloat16
    assert jnp.allclose(out.astype(jnp.float32), ref, atol=3e-2, rtol=3e-2)

    # Torch-exact promotion path (f32 output).
    out_f32 = jax.block_until_ready(rms_norm(x, weight, eps=eps, out_dtype=jnp.float32))
    assert out_f32.dtype == jnp.float32
    assert jnp.allclose(out_f32, ref, atol=1e-2, rtol=1e-2)

    # Ragged row count (rows=15): single full-dim block, no host-side pad/slice.
    x2 = jax.random.normal(jax.random.PRNGKey(1), (3, 5, hidden),
                           dtype=jnp.float32).astype(jnp.bfloat16)
    out2 = jax.block_until_ready(rms_norm(x2, weight, eps=eps))
    assert jnp.allclose(out2.astype(jnp.float32), rms_norm_reference(x2, weight, eps=eps),
                        atol=3e-2, rtol=3e-2)

    # Multi-step grid with a ragged last block (rows=40, tile=16 -> grid=3),
    # exercising Pallas' OOB masking instead of host-side pad/slice.
    x3 = jax.random.normal(jax.random.PRNGKey(2), (2, 20, hidden),
                           dtype=jnp.float32).astype(jnp.bfloat16)
    out3 = jax.block_until_ready(rms_norm(x3, weight, eps=eps, tile_rows=16))
    assert jnp.allclose(out3.astype(jnp.float32), rms_norm_reference(x3, weight, eps=eps),
                        atol=3e-2, rtol=3e-2)

    print("KERNEL_OK")
</pallas_src>

<mosaic_0001>
module attributes {stable_mosaic.version = 11 : i64} {
  func.func @_rmsnorm_kernel(%arg0: i32, %arg1: memref<16x256xbf16, #tpu.memory_space<vmem>>, %arg2: memref<1x256xf32, #tpu.memory_space<vmem>>, %arg3: memref<16x256xbf16, #tpu.memory_space<vmem>>) attributes {dimension_semantics = [#tpu.dimension_semantics<parallel>], iteration_bounds = array<i64: 1>, scalar_prefetch = 0 : i64, scratch_operands = 0 : i64, tpu.core_type = #tpu.core_type<tc>, window_params = [{transform_indices = @transform_0, window_bounds = array<i64: 16, 256>}, {pipeline_mode = #tpu.pipeline_mode<synchronous>, transform_indices = @transform_1, window_bounds = array<i64: 1, 256>}, {transform_indices = @transform_2, window_bounds = array<i64: 16, 256>}]} {
    %c0 = arith.constant 0 : index
    %c0_0 = arith.constant 0 : index
    %0 = vector.load %arg1[%c0, %c0_0] : memref<16x256xbf16, #tpu.memory_space<vmem>>, vector<16x256xbf16>
    %1 = arith.extf %0 : vector<16x256xbf16> to vector<16x256xf32>
    %2 = arith.mulf %1, %1 : vector<16x256xf32>
    %cst = arith.constant dense<0.000000e+00> : vector<16xf32>
    %3 = vector.multi_reduction <add>, %2, %cst [1] : vector<16x256xf32> to vector<16xf32>
    %4 = vector.shape_cast %3 : vector<16xf32> to vector<16x1xf32>
    %cst_1 = arith.constant 3.906250e-03 : f32
    %5 = vector.broadcast %cst_1 : f32 to vector<16x1xf32>
    %6 = arith.mulf %4, %5 : vector<16x1xf32>
    %cst_2 = arith.constant 9.99999974E-6 : f32
    %7 = vector.broadcast %cst_2 : f32 to vector<16x1xf32>
    %8 = arith.addf %6, %7 : vector<16x1xf32>
    %9 = math.rsqrt %8 : vector<16x1xf32>
    %c0_3 = arith.constant 0 : index
    %c0_4 = arith.constant 0 : index
    %10 = vector.load %arg1[%c0_3, %c0_4] : memref<16x256xbf16, #tpu.memory_space<vmem>>, vector<16x256xbf16>
    %11 = arith.extf %10 : vector<16x256xbf16> to vector<16x256xf32>
    %12 = vector.broadcast %9 : vector<16x1xf32> to vector<16x256xf32>
    %13 = arith.mulf %11, %12 : vector<16x256xf32>
    %14 = arith.truncf %13 : vector<16x256xf32> to vector<16x256xbf16>
    %15 = arith.extf %14 : vector<16x256xbf16> to vector<16x256xf32>
    %c0_5 = arith.constant 0 : index
    %c0_6 = arith.constant 0 : index
    %16 = vector.load %arg2[%c0_5, %c0_6] : memref<1x256xf32, #tpu.memory_space<vmem>>, vector<1x256xf32>
    %17 = vector.broadcast %16 : vector<1x256xf32> to vector<16x256xf32>
    %18 = arith.mulf %15, %17 : vector<16x256xf32>
    %19 = arith.truncf %18 : vector<16x256xf32> to vector<16x256xbf16>
    %c0_7 = arith.constant 0 : index
    %c0_8 = arith.constant 0 : index
    %20 = vector.load %arg3[%c0_7, %c0_8] : memref<16x256xbf16, #tpu.memory_space<vmem>>, vector<16x256xbf16>
    tpu.vector_store %arg3[%c0_7, %c0_8], %19 {strides = array<i32>} : memref<16x256xbf16, #tpu.memory_space<vmem>>, vector<16x256xbf16>,
    return
  }
  func.func @transform_0(%arg0: i32) -> (i32, i32) {
    %c0_i32 = arith.constant 0 : i32
    %c0_i32_0 = arith.constant 0 : i32
    return %arg0, %c0_i32 : i32, i32
  }
  func.func @transform_1(%arg0: i32) -> (i32, i32) {
    %c0_i32 = arith.constant 0 : i32
    %c0_i32_0 = arith.constant 0 : i32
    %c0_i32_1 = arith.constant 0 : i32
    return %c0_i32, %c0_i32_0 : i32, i32
  }
  func.func @transform_2(%arg0: i32) -> (i32, i32) {
    %c0_i32 = arith.constant 0 : i32
    %c0_i32_0 = arith.constant 0 : i32
    return %arg0, %c0_i32 : i32, i32
  }
}

</mosaic_0001>

<llo_original>
// kernel: tpu_custom_call.1
$region0: #{tpu_custom_call.1}
  #allocation0 [shape = 'u32[]', space=smem, size = 0x4, offset = 0x4, fixed_abs, tag = 'smem constant byte address 0x4 - core index']
  #allocation1 [shape = 'u32[144,128]{1,0:T(1,128)}', space=vmem, size = 0x12000, scoped, tag = 'internal scratch']
  %s0 = inlined_call_operand.hbm [shape: bf16[16,256], index: 0, kind: input, shape index: {}]
  %s1 = inlined_call_operand.vmem [shape: f32[1,256], index: 1, kind: input, shape index: {}]
  %s2 = inlined_call_operand.hbm [shape: bf16[16,256], index: 2, kind: output, shape index: {}]
  %s3 = sld [smem:[#allocation0]]
  $region22: #{tpu_custom_call.1} parent=0
    _
  %s5 = ssub.s32 1, %s3
  %s6 = scalar_select 0, %s5, %s3
  $region1: #{tpu_custom_call.1} parent=0
    #allocation2 [shape = 'u8[8192]{0}', space=vmem, size = 0x2000, scoped, tag = 'input window, operand 0, single buffered']
    #allocation3 [shape = 's32[1]{0}', space=sflag, size = 0x4, scoped, tag = 'scoped memory for tpu_custom_call.1']
    #allocation4 [shape = 's32[1]{0}', space=sflag, size = 0x4, scoped, tag = 'scoped memory for tpu_custom_call.1']
    #allocation5 [shape = 'u8[8192]{0}', space=vmem, size = 0x2000, scoped, tag = 'output window, operand 0, single buffered']
    %7 = vsyncpa [#allocation3], 0
    %8 = vsyncpa [#allocation4], 0
    // Predicated region
    $region2: #{tpu_custom_call.1} parent=1 // pred_check
      _
    $region3: #{tpu_custom_call.1} parent=1 // pred_check_branch
      %10 = sbr.rel (0) target = $region5
    $region4: #{tpu_custom_call.1} parent=1 // pred_region
      %s12 = ssub.s32 256, 256
      %13 = vsyncadd [#allocation3], %s12
      %s14 = sshll.u32 [#allocation2], 4
      %s15 = int_to_ptr.vmem [resolvable:$true] %s14
      %20 = dma.hbm_to_vmem [thread:$0]  %s0, 256, %s15, [#allocation3], 128, 128, 8
    $region5: #{tpu_custom_call.1} parent=1 // pred_fallthru
      _
    // Predicated region
    $region6: #{tpu_custom_call.1} parent=1 // pred_check
      _
    $region7: #{tpu_custom_call.1} parent=1 // pred_check_branch
      %22 = sbr.rel (0) target = $region9
    $region8: #{tpu_custom_call.1} parent=1 // pred_region
      _
    $region9: #{tpu_custom_call.1} parent=1 // pred_fallthru
      _
    // Predicated region
    $region10: #{tpu_custom_call.1} parent=1 // pred_check
      _
    $region11: #{tpu_custom_call.1} parent=1 // pred_check_branch
      %24 = sbr.rel (0) target = $region13
    $region12: #{tpu_custom_call.1} parent=1 // pred_region
      %25 = dma.done [#allocation3], 256
    $region13: #{tpu_custom_call.1} parent=1 // pred_fallthru
      _
    %v26 = vld [vmem:[#allocation2] sm:$0xff]
    %v27 = vld [vmem:[#allocation2 + $0x8] sm:$0xff]
    %v28 = vunpack.c.l.bf16 %v26
    %v29 = vunpack.c.h.bf16 %v26
    %v30 = vunpack.c.l.bf16 %v27
    %v31 = vunpack.c.h.bf16 %v27
    %v32 = vmul.f32 %v28, %v28
    %v33 = vmul.f32 %v29, %v29
    %v34 = vmul.f32 %v30, %v30
    %v35 = vmul.f32 %v31, %v31
    %v36 = vadd.f32 %v32, %v33
    %37 = vadd.xlane.f32.xlu0 %v36
    %v38 = vpop.xlane.xlu0 %37
    %v39 = vadd.f32 %v34, %v35
    %40 = vadd.xlane.f32.xlu0 %v39
    %v41 = vpop.xlane.xlu0 %40
    %v42 = vmul.f32 %v38, 0.00390625
    %v43 = vmul.f32 %v41, 0.00390625
    %v44 = vadd.f32 %v42, 1e-05
    %v45 = vadd.f32 %v43, 1e-05
    %v46 = vrsqrt.pop %v44
    %v47 = vrsqrt.pop %v45
    %v48 = vmul.f32 %v28, %v46
    %v49 = vmul.f32 %v29, %v46
    %v50 = vmul.f32 %v30, %v47
    %v51 = vmul.f32 %v31, %v47
    %v52 = vpack.c.bf16 %v50, %v48
    %v53 = vpack.c.bf16 %v51, %v49
    %v54 = vunpack.c.l.bf16 %v52
    %v55 = vunpack.c.l.bf16 %v53
    %v56 = vunpack.c.h.bf16 %v52
    %v57 = vunpack.c.h.bf16 %v53
    %v58 = vld [vmem:[%s1] sm:$0x3]
    %v60 = vlaneseq
    %v61 = vshrl.u32 %v60, 7
    %v62 = vsub.s32 0, %v61
    %v63 = vrot.slane %v58, %v62
    %v64 = vlaneseq
    %v65 = vshrl.u32 %v64, 7
    %v66 = vsub.s32 1, %v65
    %v67 = vrot.slane %v58, %v66
    %v70 = vmul.f32 %v54, %v63
    %v71 = vmul.f32 %v55, %v67
    %v72 = vmul.f32 %v56, %v63
    %v73 = vmul.f32 %v57, %v67
    %v74 = vpack.c.bf16 %v72, %v70
    %v75 = vpack.c.bf16 %v73, %v71
    %v78 = vunpack.c.l.b16 %v74
    %v79 = vunpack.c.l.b16 %v75
    %v80 = vunpack.c.h.b16 %v74
    %v81 = vunpack.c.h.b16 %v75
    %v82 = vpack.c.b16 %v79, %v78
    %v83 = vpack.c.b16 %v81, %v80
    %86 = vst [vmem:[#allocation5] sm:$0xff] %v82
    %87 = vst [vmem:[#allocation5 + $0x8] sm:$0xff] %v83
    // Predicated region
    $region14: #{tpu_custom_call.1} parent=1 // pred_check
      _
    $region15: #{tpu_custom_call.1} parent=1 // pred_check_branch
      %89 = sbr.rel (0) target = $region17
    $region16: #{tpu_custom_call.1} parent=1 // pred_region
      %s91 = ssub.s32 256, 256
      %92 = vsyncadd [#allocation4], %s91
      %s93 = sshll.u32 [#allocation5], 4
      %s94 = int_to_ptr.vmem [resolvable:$true] %s93
      %99 = dma.vmem_to_hbm [thread:$0]  %s94, 256, %s2, [#allocation4], 128, 128, 8
    $region17: #{tpu_custom_call.1} parent=1 // pred_fallthru
      _
    // Predicated region
    $region18: #{tpu_custom_call.1} parent=1 // pred_check
      _
    $region19: #{tpu_custom_call.1} parent=1 // pred_check_branch
      %101 = sbr.rel (0) target = $region21
    $region20: #{tpu_custom_call.1} parent=1 // pred_region
      %102 = dma.done [#allocation4], 256
    $region21: #{tpu_custom_call.1} parent=1 // pred_fallthru
      _
    %103 = vsyncpa [#allocation3], 1
    %104 = vsyncpa [#allocation4], 1

</llo_original>
